<compile_context>
chip_gen: v5e
topology: v5e:2x2
jax: 0.10.0
libtpu: 0.0.40
codegen_flags: <defaults>
</compile_context>

<pallas_src>
import functools

import numpy as np

import jax
import jax.numpy as jnp
from jax.experimental import pallas as pl
from jax.experimental.pallas import tpu as pltpu


# ----------------------------------------------------------------------------- kernel
def _capsule_kernel(x_ref, w_ref, o_ref, *, num_units, unit_size, matmul_dtype):
    # x_ref: (TB, K*I)   w_ref: (K*I, J*U)   o_ref: (TB, J*U), all VMEM-resident.
    # In-kernel cast (no-op for the f32 path): keeps HBM traffic at the input's
    # native width while still feeding native bf16 MXU passes on v6e/v7x.
    x = x_ref[...].astype(matmul_dtype)
    w = w_ref[...].astype(matmul_dtype)

    # Single fused MXU matmul with f32 accumulation:
    #   s[b, j*U+u] = sum_{k,i} x[b, k*I+i] * W[0, i, j, u, k]  (== sum_i u_hat[b,i,j,u])
    s = jnp.dot(x, w, preferred_element_type=jnp.float32)

    U = unit_size
    # squash(): norm over the capsule (num_units) axis per (batch, u) element,
    # faithfully matching the reference's torch.sum(s**2, dim=2).
    chunks = [s[:, j * U:(j + 1) * U] for j in range(num_units)]   # static lane slices
    mag_sq = chunks[0] * chunks[0]
    for c in chunks[1:]:
        mag_sq = mag_sq + c * c
    mag = jnp.sqrt(mag_sq)
    # (mag_sq/(1+mag_sq)) / mag  ==  mag / (1+mag_sq)  -- one divide, 0-safe.
    scale = mag / (1.0 + mag_sq)                                    # (TB, U)

    # One lane-dense store of the whole (TB, J*U) slab.
    o_ref[...] = jnp.concatenate([c * scale for c in chunks], axis=1).astype(o_ref.dtype)


# --------------------------------------------------------------------------- wrappers
def flatten_capsule_weight(W):
    """(1, in_channels, num_units, unit_size, in_units) -> (in_units*in_channels, num_units*unit_size).

    Do this once at parameter-setup time (weights are static); it is hoisted out of the
    per-call path so no per-forward HBM copy of W happens.
    """
    _, I, J, U, K = W.shape
    # W[0] axes (i, j, u, k) -> (k, i, j, u) -> flat [(k*I + i), (j*U + u)]
    return jnp.transpose(W[0], (3, 0, 1, 2)).reshape(K * I, J * U)


def _round_up(n, m):
    return ((n + m - 1) // m) * m


def _default_block_batch(B):
    if B <= 512:
        # Tiny batch: a single resident block (block == full array, so the (8,128)
        # divisibility rule is satisfied trivially).
        return B
    # Large batch: aim for >= 4 grid steps so the BlockSpec pipeline double-buffers the
    # x DMA behind the matmul and both v7x TensorCores get work, while keeping per-step
    # x tiles in the 0.5-2 MiB f32 range (measured ~85%+ of HBM roofline).  The 2048 cap
    # keeps 2x double-buffered x tiles + outputs well under v5e's 16 MiB scoped VMEM.
    return min(2048, max(512, _round_up(B // 4, 8)))


@functools.partial(
    jax.jit,
    static_argnames=("num_units", "unit_size", "block_batch", "matmul_dtype",
                     "out_dtype", "x_buffer_count"),
)
def capsule_forward(x, w_flat, *, num_units, unit_size, block_batch=None,
                    matmul_dtype=None, out_dtype=jnp.float32, x_buffer_count=None):
    """x: (batch, in_units, in_channels); w_flat from flatten_capsule_weight(W).

    Returns (batch, num_units, unit_size), matching v_j.squeeze(1).squeeze(-1).
    matmul_dtype=None -> use x's dtype unchanged (bf16 activations flow straight in).
    """
    B, K, I = x.shape
    IK = K * I
    JU = num_units * unit_size
    assert w_flat.shape == (IK, JU)

    if matmul_dtype is None:
        matmul_dtype = x.dtype

    # Contiguous flatten only -- NO dtype cast here (a wrapper-side cast is a separate
    # un-fused XLA op: full extra HBM read+write of x).  Casting happens in-kernel.
    x_flat = x.reshape(B, IK)

    tb = block_batch if block_batch is not None else _default_block_batch(B)

    x_spec_kwargs = {}
    if x_buffer_count is not None and x_buffer_count != 2:
        # v7x tuning knob: a 3rd buffer hides per-step DMA issue latency at 3.2 TB/s.
        x_spec_kwargs["pipeline_mode"] = pl.Buffered(x_buffer_count)

    out = pl.pallas_call(
        functools.partial(_capsule_kernel, num_units=num_units, unit_size=unit_size,
                          matmul_dtype=matmul_dtype),
        out_shape=jax.ShapeDtypeStruct((B, JU), out_dtype),
        grid=(pl.cdiv(B, tb),),
        in_specs=[
            pl.BlockSpec((tb, IK), lambda b: (b, 0), **x_spec_kwargs),  # batch tile of x
            pl.BlockSpec((IK, JU), lambda b: (0, 0)),                   # weight, resident
        ],
        out_specs=pl.BlockSpec((tb, JU), lambda b: (b, 0)),
        compiler_params=pltpu.CompilerParams(dimension_semantics=("parallel",)),
    )(x_flat, w_flat)

    return out.reshape(B, num_units, unit_size)


def capsule_layer(x, W, *, block_batch=None, matmul_dtype=None, out_dtype=jnp.float32):
    """Convenience entry: x (B, in_units, in_channels), W as in the PyTorch module."""
    J, U = W.shape[2], W.shape[3]
    return capsule_forward(x, flatten_capsule_weight(W), num_units=J, unit_size=U,
                           block_batch=block_batch, matmul_dtype=matmul_dtype,
                           out_dtype=out_dtype)


# ------------------------------------------------------------------------- references
def _reference_numpy(x, W):
    """float64 numpy transcription of CapsuleLayer.routing() (incl. the vacuous b_ij loop)."""
    x = np.asarray(x, np.float64)
    W = np.asarray(W, np.float64)
    B = x.shape[0]
    _, I, J, U, K = W.shape
    xt = np.transpose(x, (0, 2, 1))                                   # (B, I, K)
    xs = np.broadcast_to(xt[:, :, None, :, None], (B, I, J, K, 1))
    Wb = np.broadcast_to(W, (B, I, J, U, K))
    u_hat = np.matmul(Wb, xs)                                         # (B, I, J, U, 1)
    b_ij = np.zeros((1, I, J, 1), np.float64)
    v_j = None
    for _ in range(2):
        e = np.exp(b_ij - b_ij.max(axis=-1, keepdims=True))
        c_ij = e / e.sum(axis=-1, keepdims=True)                      # softmax over size-1 axis == 1
        c = np.broadcast_to(c_ij, (B, I, J, 1))[..., None]            # (B, I, J, 1, 1)
        s_j = np.sum(c * u_hat, axis=1, keepdims=True)                # (B, 1, J, U, 1)
        mag_sq = np.sum(s_j ** 2, axis=2, keepdims=True)
        mag = np.sqrt(mag_sq)
        v_j = mag_sq / (1.0 + mag_sq) * (s_j / mag)
        v_j1 = np.broadcast_to(v_j, (B, I, J, U, 1))
        u_vj1 = np.matmul(np.swapaxes(u_hat, 3, 4), v_j1)[..., 0]     # (B, I, J, 1)
        b_ij = b_ij + u_vj1.mean(axis=0, keepdims=True)
    return v_j[:, 0, :, :, 0]                                         # (B, J, U)


def _closed_form_numpy(x, W):
    """float64 closed form (the routing loop is a no-op): squash(sum_i u_hat)."""
    x = np.asarray(x, np.float64)
    W64 = np.asarray(W[0], np.float64)
    s = np.einsum("bki,ijuk->bju", x, W64)
    mag_sq = np.sum(s * s, axis=1, keepdims=True)                     # norm over num_units
    mag = np.sqrt(mag_sq)
    return mag_sq / (1.0 + mag_sq) * (s / mag)


# -------------------------------------------------------------------------------- demo
if __name__ == "__main__":
    # Shapes consistent with the module: in_units=8, in_channels=32, num_units=4,
    # unit_size=16, batch=2.
    batch, in_units, in_channels, num_units, unit_size = 2, 8, 32, 4, 16

    key = jax.random.PRNGKey(0)
    kx, kw, kx2 = jax.random.split(key, 3)
    x = jax.random.normal(kx, (batch, in_units, in_channels), dtype=jnp.float32)
    W = jax.random.normal(
        kw, (1, in_channels, num_units, unit_size, in_units), dtype=jnp.float32
    )

    # Flatten the (static) weight once, outside the per-call path.
    w_flat = flatten_capsule_weight(W)

    # f32 path, tiny batch (single resident block).  Tolerance allows for MXU f32
    # pass decomposition vs the float64 reference.
    out = jax.block_until_ready(
        capsule_forward(x, w_flat, num_units=num_units, unit_size=unit_size)
    )
    ref = _reference_numpy(x, W)
    assert out.shape == (batch, num_units, unit_size)
    assert np.allclose(np.asarray(out), ref, rtol=5e-3, atol=5e-3), "f32 mismatch vs reference"

    # bf16-MXU path: no wrapper-side cast; x stays f32 in HBM, cast happens in-kernel.
    out_bf16 = jax.block_until_ready(
        capsule_forward(x, w_flat, num_units=num_units, unit_size=unit_size,
                        matmul_dtype=jnp.bfloat16)
    )
    assert np.allclose(np.asarray(out_bf16), ref, rtol=6e-2, atol=6e-2), "bf16 mismatch vs reference"

    # Larger batch exercises the multi-step pipelined grid (default tb=512 -> grid=(2,)).
    B2 = 1024
    x2 = jax.random.normal(kx2, (B2, in_units, in_channels), dtype=jnp.float32)
    out2 = jax.block_until_ready(
        capsule_forward(x2, w_flat, num_units=num_units, unit_size=unit_size)
    )
    ref2 = _closed_form_numpy(x2, W)
    assert out2.shape == (B2, num_units, unit_size)
    assert np.allclose(np.asarray(out2), ref2, rtol=5e-3, atol=5e-3), "f32 batch-1024 mismatch"

    print("KERNEL_OK")
</pallas_src>

<mosaic_0001>
module attributes {stable_mosaic.version = 11 : i64} {
  func.func @_capsule_kernel(%arg0: i32, %arg1: memref<2x256xf32, #tpu.memory_space<vmem>>, %arg2: memref<256x64xf32, #tpu.memory_space<vmem>>, %arg3: memref<2x64xf32, #tpu.memory_space<vmem>>) attributes {dimension_semantics = [#tpu.dimension_semantics<parallel>], iteration_bounds = array<i64: 1>, scalar_prefetch = 0 : i64, scratch_operands = 0 : i64, tpu.core_type = #tpu.core_type<tc>, window_params = [{transform_indices = @transform_0, window_bounds = array<i64: 2, 256>}, {pipeline_mode = #tpu.pipeline_mode<synchronous>, transform_indices = @transform_1, window_bounds = array<i64: 256, 64>}, {transform_indices = @transform_2, window_bounds = array<i64: 2, 64>}]} {
    %c0 = arith.constant 0 : index
    %c0_0 = arith.constant 0 : index
    %0 = vector.load %arg1[%c0, %c0_0] : memref<2x256xf32, #tpu.memory_space<vmem>>, vector<2x256xf32>
    %c0_1 = arith.constant 0 : index
    %c0_2 = arith.constant 0 : index
    %1 = vector.load %arg2[%c0_1, %c0_2] : memref<256x64xf32, #tpu.memory_space<vmem>>, vector<256x64xf32>
    %cst = arith.constant dense<0.000000e+00> : vector<2x64xf32>
    %2 = tpu.matmul %0, %1, %cst {dimension_numbers = #tpu.dot_dimension_numbers<[1], [0], [0], [1], [0, 0, 1, 1], [], []>} : vector<2x256xf32>, vector<256x64xf32>, vector<2x64xf32> -> vector<2x64xf32>
    %3 = vector.extract_strided_slice %2 {offsets = [0, 0], sizes = [2, 16], strides = [1, 1]} : vector<2x64xf32> to vector<2x16xf32>
    %4 = vector.extract_strided_slice %2 {offsets = [0, 16], sizes = [2, 16], strides = [1, 1]} : vector<2x64xf32> to vector<2x16xf32>
    %5 = vector.extract_strided_slice %2 {offsets = [0, 32], sizes = [2, 16], strides = [1, 1]} : vector<2x64xf32> to vector<2x16xf32>
    %6 = vector.extract_strided_slice %2 {offsets = [0, 48], sizes = [2, 16], strides = [1, 1]} : vector<2x64xf32> to vector<2x16xf32>
    %7 = arith.mulf %3, %3 : vector<2x16xf32>
    %8 = arith.mulf %4, %4 : vector<2x16xf32>
    %9 = arith.addf %7, %8 : vector<2x16xf32>
    %10 = arith.mulf %5, %5 : vector<2x16xf32>
    %11 = arith.addf %9, %10 : vector<2x16xf32>
    %12 = arith.mulf %6, %6 : vector<2x16xf32>
    %13 = arith.addf %11, %12 : vector<2x16xf32>
    %14 = math.sqrt %13 : vector<2x16xf32>
    %cst_3 = arith.constant 1.000000e+00 : f32
    %15 = vector.broadcast %cst_3 : f32 to vector<2x16xf32>
    %16 = arith.addf %15, %13 : vector<2x16xf32>
    %17 = arith.divf %14, %16 : vector<2x16xf32>
    %18 = arith.mulf %3, %17 : vector<2x16xf32>
    %19 = arith.mulf %4, %17 : vector<2x16xf32>
    %20 = arith.mulf %5, %17 : vector<2x16xf32>
    %21 = arith.mulf %6, %17 : vector<2x16xf32>
    %22 = tpu.concatenate %18, %19, %20, %21 in 1 : vector<2x16xf32>, vector<2x16xf32>, vector<2x16xf32>, vector<2x16xf32> -> vector<2x64xf32>
    %c0_4 = arith.constant 0 : index
    %c0_5 = arith.constant 0 : index
    %23 = vector.load %arg3[%c0_4, %c0_5] : memref<2x64xf32, #tpu.memory_space<vmem>>, vector<2x64xf32>
    tpu.vector_store %arg3[%c0_4, %c0_5], %22 {strides = array<i32>} : memref<2x64xf32, #tpu.memory_space<vmem>>, vector<2x64xf32>,
    return
  }
  func.func @transform_0(%arg0: i32) -> (i32, i32) {
    %c0_i32 = arith.constant 0 : i32
    %c0_i32_0 = arith.constant 0 : i32
    return %arg0, %c0_i32 : i32, i32
  }
  func.func @transform_1(%arg0: i32) -> (i32, i32) {
    %c0_i32 = arith.constant 0 : i32
    %c0_i32_0 = arith.constant 0 : i32
    %c0_i32_1 = arith.constant 0 : i32
    return %c0_i32, %c0_i32_0 : i32, i32
  }
  func.func @transform_2(%arg0: i32) -> (i32, i32) {
    %c0_i32 = arith.constant 0 : i32
    %c0_i32_0 = arith.constant 0 : i32
    return %arg0, %c0_i32 : i32, i32
  }
}

</mosaic_0001>

<llo_original>
// kernel: capsule_forward.1
$region0: #{capsule_forward.1}
  #allocation0 [shape = 'u32[]', space=smem, size = 0x4, offset = 0x4, fixed_abs, tag = 'smem constant byte address 0x4 - core index']
  #allocation1 [shape = 'u32[72,128]{1,0:T(1,128)}', space=vmem, size = 0x9000, scoped, tag = 'internal scratch']
  %s0 = inlined_call_operand.vmem [shape: f32[2,256], index: 0, kind: input, shape index: {}]
  %s1 = inlined_call_operand.vmem [shape: f32[256,64], index: 1, kind: input, shape index: {}]
  %s2 = inlined_call_operand.vmem [shape: f32[2,64], index: 2, kind: output, shape index: {}]
  %s3 = sld [smem:[#allocation0]]
  $region18: #{capsule_forward.1} parent=0
    _
  %s5 = ssub.s32 1, %s3
  %s6 = scalar_select 0, %s5, %s3
  // Predicated region
  $region2: #{capsule_forward.1} parent=0 // pred_check
    _
  $region3: #{capsule_forward.1} parent=0 // pred_check_branch
    %8 = sbr.rel (0) target = $region5
  $region4: #{capsule_forward.1} parent=0 // pred_region
    _
  $region5: #{capsule_forward.1} parent=0 // pred_fallthru
    _
  // Predicated region
  $region6: #{capsule_forward.1} parent=0 // pred_check
    _
  $region7: #{capsule_forward.1} parent=0 // pred_check_branch
    %10 = sbr.rel (0) target = $region9
  $region8: #{capsule_forward.1} parent=0 // pred_region
    _
  $region9: #{capsule_forward.1} parent=0 // pred_fallthru
    _
  %v11 = vld [vmem:[%s0] sm:$0xf]
  %v12 = vld [vmem:[%s1] sm:$0xff]
  %v13 = vld [vmem:[%s1 + $0x8] sm:$0xff]
  %v14 = vld [vmem:[%s1 + $0x10] sm:$0xff]
  %v15 = vld [vmem:[%s1 + $0x18] sm:$0xff]
  %v16 = vld [vmem:[%s1 + $0x20] sm:$0xff]
  %v17 = vld [vmem:[%s1 + $0x28] sm:$0xff]
  %v18 = vld [vmem:[%s1 + $0x30] sm:$0xff]
  %v19 = vld [vmem:[%s1 + $0x38] sm:$0xff]
  %v20 = vld [vmem:[%s1 + $0x40] sm:$0xff]
  %v21 = vld [vmem:[%s1 + $0x48] sm:$0xff]
  %v22 = vld [vmem:[%s1 + $0x50] sm:$0xff]
  %v23 = vld [vmem:[%s1 + $0x58] sm:$0xff]
  %v24 = vld [vmem:[%s1 + $0x60] sm:$0xff]
  %v25 = vld [vmem:[%s1 + $0x68] sm:$0xff]
  %v26 = vld [vmem:[%s1 + $0x70] sm:$0xff]
  %v27 = vld [vmem:[%s1 + $0x78] sm:$0xff]
  %v28 = vld [vmem:[%s1 + $0x80] sm:$0xff]
  %v29 = vld [vmem:[%s1 + $0x88] sm:$0xff]
  %v30 = vld [vmem:[%s1 + $0x90] sm:$0xff]
  %v31 = vld [vmem:[%s1 + $0x98] sm:$0xff]
  %v32 = vld [vmem:[%s1 + $0xa0] sm:$0xff]
  %v33 = vld [vmem:[%s1 + $0xa8] sm:$0xff]
  %v34 = vld [vmem:[%s1 + $0xb0] sm:$0xff]
  %v35 = vld [vmem:[%s1 + $0xb8] sm:$0xff]
  %v36 = vld [vmem:[%s1 + $0xc0] sm:$0xff]
  %v37 = vld [vmem:[%s1 + $0xc8] sm:$0xff]
  %v38 = vld [vmem:[%s1 + $0xd0] sm:$0xff]
  %v39 = vld [vmem:[%s1 + $0xd8] sm:$0xff]
  %v40 = vld [vmem:[%s1 + $0xe0] sm:$0xff]
  %v41 = vld [vmem:[%s1 + $0xe8] sm:$0xff]
  %v42 = vld [vmem:[%s1 + $0xf0] sm:$0xff]
  %v43 = vld [vmem:[%s1 + $0xf8] sm:$0xff]
  %45 = vst [vmem:[#allocation1] ss:$4 sm:$0xff] %v11
  %v46 = vld.sshfl [vmem:[#allocation1] sm:$0xff pattern:$0x73625140]
  %v47 = vld.sshfl [vmem:[#allocation1 + $0x8] sm:$0xff pattern:$0x73625140]
  %50 = vmatpush.msra.mxu0 %v27
  %51 = vmatpush.msra.mxu0 %v26
  %52 = vmatpush.msra.mxu0 %v25
  %53 = vmatpush.msra.mxu0 %v24
  %54 = vmatpush.msra.mxu0 %v23
  %55 = vmatpush.msra.mxu0 %v22
  %56 = vmatpush.msra.mxu0 %v21
  %57 = vmatpush.msra.mxu0 %v20
  %58 = vmatpush.msra.mxu0 %v19
  %59 = vmatpush.msra.mxu0 %v18
  %60 = vmatpush.msra.mxu0 %v17
  %61 = vmatpush.msra.mxu0 %v16
  %62 = vmatpush.msra.mxu0 %v15
  %63 = vmatpush.msra.mxu0 %v14
  %64 = vmatpush.msra.mxu0 %v13
  %65 = vmatpush.msra.mxu0 %v12
  %66 = vmatmul.f32.gmra.mxu0 %v46
  %v67 = vpop.f32.mrf.mxu0
  %v68 = vadd.f32 0.0, %v67
  %69 = vdwg.mxu0
  %70 = vmatpush.msra.mxu0 %v43
  %71 = vmatpush.msra.mxu0 %v42
  %72 = vmatpush.msra.mxu0 %v41
  %73 = vmatpush.msra.mxu0 %v40
  %74 = vmatpush.msra.mxu0 %v39
  %75 = vmatpush.msra.mxu0 %v38
  %76 = vmatpush.msra.mxu0 %v37
  %77 = vmatpush.msra.mxu0 %v36
  %78 = vmatpush.msra.mxu0 %v35
  %79 = vmatpush.msra.mxu0 %v34
  %80 = vmatpush.msra.mxu0 %v33
  %81 = vmatpush.msra.mxu0 %v32
  %82 = vmatpush.msra.mxu0 %v31
  %83 = vmatpush.msra.mxu0 %v30
  %84 = vmatpush.msra.mxu0 %v29
  %85 = vmatpush.msra.mxu0 %v28
  %86 = vmatmul.f32.gmra.mxu0 %v47
  %v87 = vpop.f32.mrf.mxu0
  %v88 = vadd.f32 %v68, %v87
  %89 = vdwg.mxu0
  %v90 = vmul.f32 %v88, %v88
  %92 = vrot.lane.b32.xlu0 %v90, 112
  %v93 = vpop.permute.xlu0 %92
  %v95 = vadd.f32 %v90, %v93
  %96 = vrot.lane.b32.xlu0 %v90, 96
  %v97 = vpop.permute.xlu0 %96
  %v99 = vadd.f32 %v95, %v97
  %100 = vrot.lane.b32.xlu0 %v90, 80
  %v101 = vpop.permute.xlu0 %100
  %v103 = vadd.f32 %v99, %v101
  %v104 = vrsqrt.pop %v103
  %v105 = vmul.f32 %v104, %v103
  %v106 = vmul.f32 %v105, %v104
  %v107 = vmul.f32 0.5, %v106
  %v108 = vsub.f32 1.5, %v107
  %v109 = vmul.f32 %v104, %v108
  %v110 = vmul.f32 %v103, %v109
  %vm111 = vcmp.eq.f32.partialorder %v103, inf
  %v112 = vsel %vm111, %v103, %v110
  %vm113 = vcmp.eq.f32.partialorder %v103, 0.0
  %v114 = vand.u32 %v103, 2147483648
  %v115 = vsel %vm113, %v114, %v112
  %v116 = vadd.f32 %v103, 1.0
  %v117 = vrcp.pop %v116
  %v118 = vmul.f32 %v116, %v117
  %v119 = vsub.f32 1.0, %v118
  %v120 = vmul.f32 %v117, %v119
  %v121 = vadd.f32 %v117, %v120
  %vm122 = vweird.f32 %v116
  %vm123 = vweird.f32 %v117
  %vm124 = vmor %vm122, %vm123
  %v125 = vsel %vm124, %v117, %v121
  %v126 = vand.u32 2147483647, %v116
  %vm127 = vcmp.eq.f32.partialorder %v126, 8.507059e+37
  %v128 = vand.u32 %v116, 2147483648
  %v129 = vor.u32 1.1754944e-38, %v128
  %v130 = vsel %vm127, %v129, %v125
  %v131 = vmul.f32 %v115, %v130
  %v132 = vmul.f32 %v88, %v131
  %134 = vrot.lane.b32.xlu0 %v131, 16
  %v135 = vpop.permute.xlu0 %134
  %v137 = vmul.f32 %v88, %v135
  %138 = vrot.lane.b32.xlu0 %v131, 32
  %v139 = vpop.permute.xlu0 %138
  %v141 = vmul.f32 %v88, %v139
  %142 = vrot.lane.b32.xlu0 %v131, 48
  %v143 = vpop.permute.xlu0 %142
  %v145 = vmul.f32 %v88, %v143
  %vm146 = vcmask 130048
  %v147 = vsel %vm146, %v132, %v137
  %vm148 = vcmask 261120
  %v149 = vsel %vm148, %v147, %v141
  %vm150 = vcmask 392192
  %v151 = vsel %vm150, %v149, %v145
  %vm152 = vcmask 517120
  %153 = vst.msk [vmem:[%s2] sm:$0x3] %vm152, %v151
  // Predicated region
  $region10: #{capsule_forward.1} parent=0 // pred_check
    _
  $region11: #{capsule_forward.1} parent=0 // pred_check_branch
    %155 = sbr.rel (0) target = $region13
  $region12: #{capsule_forward.1} parent=0 // pred_region
    _
  $region13: #{capsule_forward.1} parent=0 // pred_fallthru
    _
  // Predicated region
  $region14: #{capsule_forward.1} parent=0 // pred_check
    _
  $region15: #{capsule_forward.1} parent=0 // pred_check_branch
    %157 = sbr.rel (0) target = $region17
  $region16: #{capsule_forward.1} parent=0 // pred_region
    _
  $region17: #{capsule_forward.1} parent=0 // pred_fallthru
    _

</llo_original>
